<compile_context>
chip_gen: v7x
topology: tpu7x:2x2x1
jax: 0.10.0
libtpu: 0.0.40
codegen_flags: <defaults>
</compile_context>

<pallas_src>
import functools

import jax
import jax.numpy as jnp
from jax.experimental import pallas as pl
from jax.experimental.pallas import tpu as pltpu


def _round_up(x, m):
    return (x + m - 1) // m * m


def _vmem_budget_bytes():
    """Usable VMEM budget with headroom for compiler-internal scratch."""
    try:
        cap = int(pltpu.get_tpu_info().vmem_capacity_bytes)
    except Exception:
        cap = 64 << 20  # conservative fallback: v7x per-TC VMEM
    # v7x (64 MiB) -> 48 MiB; v5e/v6e (128 MiB) -> 112 MiB.
    return max(int(cap * 0.75), cap - (16 << 20))


# --------------------------------------------------------------------------
# Kernels
# --------------------------------------------------------------------------
def _folded_kernel(x_ref, w_ref, b_ref, o_ref):
    # y = relu(x @ W + B) with W = w1 @ w2 (folded in f32), B = b1 @ w2 + b2.
    y = jnp.dot(x_ref[...], w_ref[...], preferred_element_type=jnp.float32)
    y = y + b_ref[...]
    o_ref[...] = jnp.maximum(y, 0.0).astype(o_ref.dtype)


def _resident_kernel(x_ref, w1_ref, b1_ref, w2_ref, b2_ref, o_ref):
    # Both weight matrices stay VMEM-resident across the m grid axis
    # (constant index_map -> DMA'd once). No accumulator scratch needed.
    h = jnp.dot(x_ref[...], w1_ref[...], preferred_element_type=jnp.float32)
    h = (h + b1_ref[...]).astype(w2_ref.dtype)
    # TODO(synk): training-mode dropout after fc1 / after ReLU omitted — it is
    #             identity in eval mode; add a pltpu.prng_random_bits mask for
    #             training.
    y = jnp.dot(h, w2_ref[...], preferred_element_type=jnp.float32) + b2_ref[...]
    o_ref[...] = jnp.maximum(y, 0.0).astype(o_ref.dtype)


def _kchunk_kernel(x_ref, w1_ref, b1_ref, w2_ref, b2_ref, o_ref, acc_ref):
    # Fallback when the full weights exceed the VMEM budget: chunk d_ff.
    # Grid: (m_tiles, k_chunks) with k innermost ("arbitrary").
    k = pl.program_id(1)
    last = pl.num_programs(1) - 1

    h = jnp.dot(x_ref[...], w1_ref[...], preferred_element_type=jnp.float32)
    h = (h + b1_ref[...]).astype(w2_ref.dtype)
    contrib = jnp.dot(h, w2_ref[...], preferred_element_type=jnp.float32)

    @pl.when(k == 0)
    def _init():
        acc_ref[...] = jnp.zeros_like(acc_ref)

    @pl.when(k < last)
    def _accumulate():
        acc_ref[...] += contrib

    @pl.when(k == last)
    def _finalize():
        # Fuse the last chunk's contribution with bias2 + ReLU: avoids an
        # extra (tile_m, out_p) f32 accumulator store + reload per m-tile.
        y = acc_ref[...] + contrib + b2_ref[...]
        o_ref[...] = jnp.maximum(y, 0.0).astype(o_ref.dtype)


# --------------------------------------------------------------------------
# Wrapper: prepare weights once, return a jitted apply(x)
# --------------------------------------------------------------------------
def make_position_wise_feed_forward(w1, b1, w2, b2, *,
                                    fold_weights=True,
                                    compute_dtype=jnp.bfloat16,
                                    tile_m=None,
                                    tile_k=None,
                                    force_k_chunking=False):
    """Fold/cast/pad the weights ONCE and return a jitted apply(x).

    w1: (in_f, inner_f), b1: (inner_f,), w2: (inner_f, out_f), b2: (out_f,).
    apply(x) with x: (B, S, in_f) -> (B, S, out_f) = relu(fc2(fc1(x)))
    (eval mode: both dropouts are identity).
    """
    in_f, inner_f = w1.shape
    out_f = w2.shape[1]
    cb = jnp.dtype(compute_dtype).itemsize

    in_p = _round_up(in_f, 128)
    out_p = _round_up(out_f, 128)
    inner_p = _round_up(inner_f, 128)

    budget = _vmem_budget_bytes()
    # Per-generation default row tile (v7x ~512/TC; v5e/v6e have 128 MiB VMEM
    # and benefit from larger tiles amortizing per-step overhead).
    default_tile_m = 512 if budget <= (48 << 20) else 1024
    tile_m_target = _round_up(max(int(tile_m), 128), 128) if tile_m else default_tile_m
    tile_k_target = max(int(tile_k), 128) if tile_k else 512

    w1f = w1.astype(jnp.float32)
    w2f = w2.astype(jnp.float32)
    b1f = b1.astype(jnp.float32)
    b2f = b2.astype(jnp.float32)

    def _pick_tile_m(M, need_fn):
        M128 = _round_up(M, 128)
        tm = max(128, min(tile_m_target, M128))
        if M128 > 128 and tm >= M128:
            # Ensure >=2 m-tiles so both v7x TensorCores get work.
            tm = _round_up((M128 + 1) // 2, 128)
        while tm > 128 and need_fn(tm) > budget:
            tm = max(128, _round_up(tm // 2, 128))
        return tm

    def _pick_tile_k(target):
        n = inner_p // 128
        best = 1
        for d in range(1, n + 1):
            if n % d == 0 and 128 * d <= max(target, 128):
                best = max(best, d)
        return 128 * best

    # ---------------- folded (default eval-mode) path ----------------
    if fold_weights:
        # Fold in f32 for accuracy, then cast for the MXU.
        w_fold = jnp.pad(jnp.dot(w1f, w2f).astype(compute_dtype),
                         ((0, in_p - in_f), (0, out_p - out_f)))
        b_fold = jnp.pad(jnp.dot(b1f, w2f) + b2f,
                         (0, out_p - out_f)).reshape(1, out_p)
        # TODO(synk): for extremely large in_f*out_f the folded weight may not
        #             fit VMEM; chunk out_p with a second grid axis in that case.

        @jax.jit
        def _apply(x, w_fold, b_fold):
            B, S, xin = x.shape
            assert xin == in_f
            out_dtype = x.dtype
            ob = jnp.dtype(out_dtype).itemsize
            M = B * S

            def need(tm):
                return (2 * tm * in_p * cb          # x tiles (double-buffered)
                        + 2 * in_p * out_p * cb     # folded W (resident)
                        + 2 * out_p * 4             # folded bias
                        + 2 * tm * out_p * ob       # output tiles
                        + tm * out_p * 4)           # f32 intermediate

            tm = _pick_tile_m(M, need)
            M_p = _round_up(M, tm)
            x2d = jnp.pad(x.reshape(M, in_f).astype(compute_dtype),
                          ((0, M_p - M), (0, in_p - in_f)))

            cost = pl.CostEstimate(
                flops=2 * M_p * in_p * out_p,
                transcendentals=0,
                bytes_accessed=(x2d.size * cb + w_fold.size * cb
                                + b_fold.size * 4 + M_p * out_p * ob))

            out2d = pl.pallas_call(
                _folded_kernel,
                out_shape=jax.ShapeDtypeStruct((M_p, out_p), out_dtype),
                grid_spec=pltpu.PrefetchScalarGridSpec(
                    num_scalar_prefetch=0,
                    grid=(M_p // tm,),
                    in_specs=[
                        pl.BlockSpec((tm, in_p), lambda i: (i, 0)),
                        pl.BlockSpec((in_p, out_p), lambda i: (0, 0)),
                        pl.BlockSpec((1, out_p), lambda i: (0, 0)),
                    ],
                    out_specs=pl.BlockSpec((tm, out_p), lambda i: (i, 0)),
                ),
                compiler_params=pltpu.CompilerParams(
                    dimension_semantics=("parallel",),
                    vmem_limit_bytes=budget),
                cost_estimate=cost,
            )(x2d, w_fold, b_fold)
            return out2d[:M, :out_f].reshape(B, S, out_f)

        return lambda x: _apply(x, w_fold, b_fold)

    # ---------------- two-matmul path ----------------
    w1_p = jnp.pad(w1f.astype(compute_dtype),
                   ((0, in_p - in_f), (0, inner_p - inner_f)))
    b1_p = jnp.pad(b1f, (0, inner_p - inner_f)).reshape(1, inner_p)
    w2_p = jnp.pad(w2f.astype(compute_dtype),
                   ((0, inner_p - inner_f), (0, out_p - out_f)))
    b2_p = jnp.pad(b2f, (0, out_p - out_f)).reshape(1, out_p)

    @jax.jit
    def _apply2(x, w1_p, b1_p, w2_p, b2_p):
        B, S, xin = x.shape
        assert xin == in_f
        out_dtype = x.dtype
        ob = jnp.dtype(out_dtype).itemsize
        M = B * S

        def need_resident(tm):
            return (2 * tm * in_p * cb
                    + 2 * in_p * inner_p * cb + 2 * inner_p * 4   # w1, b1
                    + 2 * inner_p * out_p * cb + 2 * out_p * 4    # w2, b2
                    + 2 * tm * out_p * ob                         # out tiles
                    + tm * inner_p * (4 + cb)                     # h f32 + cast
                    + tm * out_p * 4)                             # y f32

        tm_res = _pick_tile_m(M, need_resident)
        use_resident = (not force_k_chunking) and (need_resident(tm_res) <= budget)

        if use_resident:
            tm = tm_res
            M_p = _round_up(M, tm)
            x2d = jnp.pad(x.reshape(M, in_f).astype(compute_dtype),
                          ((0, M_p - M), (0, in_p - in_f)))
            cost = pl.CostEstimate(
                flops=2 * M_p * inner_p * (in_p + out_p),
                transcendentals=0,
                bytes_accessed=(x2d.size * cb
                                + (w1_p.size + w2_p.size) * cb
                                + (b1_p.size + b2_p.size) * 4
                                + M_p * out_p * ob))
            out2d = pl.pallas_call(
                _resident_kernel,
                out_shape=jax.ShapeDtypeStruct((M_p, out_p), out_dtype),
                grid_spec=pltpu.PrefetchScalarGridSpec(
                    num_scalar_prefetch=0,
                    grid=(M_p // tm,),
                    in_specs=[
                        pl.BlockSpec((tm, in_p), lambda i: (i, 0)),
                        pl.BlockSpec((in_p, inner_p), lambda i: (0, 0)),
                        pl.BlockSpec((1, inner_p), lambda i: (0, 0)),
                        pl.BlockSpec((inner_p, out_p), lambda i: (0, 0)),
                        pl.BlockSpec((1, out_p), lambda i: (0, 0)),
                    ],
                    out_specs=pl.BlockSpec((tm, out_p), lambda i: (i, 0)),
                ),
                compiler_params=pltpu.CompilerParams(
                    dimension_semantics=("parallel",),
                    vmem_limit_bytes=budget),
                cost_estimate=cost,
            )(x2d, w1_p, b1_p, w2_p, b2_p)
            return out2d[:M, :out_f].reshape(B, S, out_f)

        # ----- k-chunked fallback (weights too big for VMEM, or forced) -----
        tk = _pick_tile_k(tile_k_target)

        def need_chunk(tm):
            return (2 * tm * in_p * cb
                    + 2 * in_p * tk * cb + 2 * tk * 4
                    + 2 * tk * out_p * cb + 2 * out_p * 4
                    + 2 * tm * out_p * ob
                    + tm * out_p * 4                 # f32 accumulator scratch
                    + tm * tk * (4 + cb)             # h f32 + bf16 cast
                    + tm * out_p * 4)                # contrib

        tm = _pick_tile_m(M, need_chunk)
        M_p = _round_up(M, tm)
        num_k = inner_p // tk
        m_tiles = M_p // tm
        x2d = jnp.pad(x.reshape(M, in_f).astype(compute_dtype),
                      ((0, M_p - M), (0, in_p - in_f)))
        cost = pl.CostEstimate(
            flops=2 * M_p * inner_p * (in_p + out_p),
            transcendentals=0,
            bytes_accessed=(x2d.size * cb
                            + m_tiles * (w1_p.size + w2_p.size) * cb
                            + m_tiles * b1_p.size * 4 + b2_p.size * 4
                            + M_p * out_p * ob))
        out2d = pl.pallas_call(
            _kchunk_kernel,
            out_shape=jax.ShapeDtypeStruct((M_p, out_p), out_dtype),
            grid_spec=pltpu.PrefetchScalarGridSpec(
                num_scalar_prefetch=0,
                grid=(m_tiles, num_k),
                in_specs=[
                    pl.BlockSpec((tm, in_p), lambda i, k: (i, 0)),
                    pl.BlockSpec((in_p, tk), lambda i, k: (0, k)),
                    pl.BlockSpec((1, tk), lambda i, k: (0, k)),
                    pl.BlockSpec((tk, out_p), lambda i, k: (k, 0)),
                    pl.BlockSpec((1, out_p), lambda i, k: (0, 0)),
                ],
                out_specs=pl.BlockSpec((tm, out_p), lambda i, k: (i, 0)),
                scratch_shapes=[pltpu.VMEM((tm, out_p), jnp.float32)],
            ),
            compiler_params=pltpu.CompilerParams(
                dimension_semantics=("parallel", "arbitrary"),
                vmem_limit_bytes=budget),
            cost_estimate=cost,
        )(x2d, w1_p, b1_p, w2_p, b2_p)
        return out2d[:M, :out_f].reshape(B, S, out_f)

    return lambda x: _apply2(x, w1_p, b1_p, w2_p, b2_p)


# --------------------------------------------------------------------------
# Demo / self-test
# --------------------------------------------------------------------------
def _init_linear(key, fan_in, fan_out, dtype=jnp.float32):
    """PyTorch-style init U(-1/sqrt(fan_in), 1/sqrt(fan_in)); weight returned
    already transposed to (fan_in, fan_out)."""
    kw, kb = jax.random.split(key)
    bound = 1.0 / jnp.sqrt(fan_in)
    w = jax.random.uniform(kw, (fan_in, fan_out), dtype, -bound, bound)
    b = jax.random.uniform(kb, (fan_out,), dtype, -bound, bound)
    return w, b


if __name__ == "__main__":
    batch, seq = 2, 8
    in_features, inner_features, out_features = 32, 64, 32

    key = jax.random.PRNGKey(0)
    kx, k1, k2 = jax.random.split(key, 3)
    x = jax.random.normal(kx, (batch, seq, in_features), jnp.float32)
    w1, b1 = _init_linear(k1, in_features, inner_features)
    w2, b2 = _init_linear(k2, inner_features, out_features)

    # f32 reference matching the PyTorch eval-mode forward: relu(fc2(fc1(x))).
    ref = jnp.maximum((x @ w1 + b1) @ w2 + b2, 0.0)

    # 1) Default path: eval-mode folded weights, single matmul+bias+ReLU.
    ffn_folded = make_position_wise_feed_forward(w1, b1, w2, b2,
                                                 fold_weights=True)
    out_folded = jax.block_until_ready(ffn_folded(x))
    assert out_folded.shape == (batch, seq, out_features)
    err0 = float(jnp.max(jnp.abs(out_folded - ref)))
    assert jnp.allclose(out_folded, ref, atol=5e-2, rtol=5e-2), err0

    # 2) Two-matmul path with VMEM-resident weights (no k axis, no scratch).
    ffn_two = make_position_wise_feed_forward(w1, b1, w2, b2,
                                              fold_weights=False)
    out_two = jax.block_until_ready(ffn_two(x))
    err1 = float(jnp.max(jnp.abs(out_two - ref)))
    assert jnp.allclose(out_two, ref, atol=5e-2, rtol=5e-2), err1

    # 3) k-chunked fallback, exercised explicitly with a larger d_ff and a
    #    forced small tile_k (2 chunks) plus a non-multiple-of-128 out dim.
    inner2, out2 = 256, 48
    k3, k4 = jax.random.split(jax.random.PRNGKey(1))
    w1c, b1c = _init_linear(k3, in_features, inner2)
    w2c, b2c = _init_linear(k4, inner2, out2)
    ffn_chunk = make_position_wise_feed_forward(
        w1c, b1c, w2c, b2c, fold_weights=False,
        force_k_chunking=True, tile_k=128)
    out_chunk = jax.block_until_ready(ffn_chunk(x))
    ref2 = jnp.maximum((x @ w1c + b1c) @ w2c + b2c, 0.0)
    assert out_chunk.shape == (batch, seq, out2)
    err2 = float(jnp.max(jnp.abs(out_chunk - ref2)))
    assert jnp.allclose(out_chunk, ref2, atol=5e-2, rtol=5e-2), err2

    print("KERNEL_OK")
</pallas_src>

<mosaic_0001>
module attributes {stable_mosaic.version = 11 : i64} {
  func.func @_folded_kernel(%arg0: i32, %arg1: memref<128x128xbf16, #tpu.memory_space<vmem>>, %arg2: memref<128x128xbf16, #tpu.memory_space<vmem>>, %arg3: memref<1x128xf32, #tpu.memory_space<vmem>>, %arg4: memref<128x128xf32, #tpu.memory_space<vmem>>) attributes {dimension_semantics = [#tpu.dimension_semantics<parallel>], iteration_bounds = array<i64: 1>, scalar_prefetch = 0 : i64, scratch_operands = 0 : i64, tpu.core_type = #tpu.core_type<tc>, window_params = [{transform_indices = @transform_0, window_bounds = array<i64: 128, 128>}, {pipeline_mode = #tpu.pipeline_mode<synchronous>, transform_indices = @transform_1, window_bounds = array<i64: 128, 128>}, {pipeline_mode = #tpu.pipeline_mode<synchronous>, transform_indices = @transform_2, window_bounds = array<i64: 1, 128>}, {transform_indices = @transform_3, window_bounds = array<i64: 128, 128>}]} {
    %c0 = arith.constant 0 : index
    %c0_0 = arith.constant 0 : index
    %0 = vector.load %arg1[%c0, %c0_0] : memref<128x128xbf16, #tpu.memory_space<vmem>>, vector<128x128xbf16>
    %c0_1 = arith.constant 0 : index
    %c0_2 = arith.constant 0 : index
    %1 = vector.load %arg2[%c0_1, %c0_2] : memref<128x128xbf16, #tpu.memory_space<vmem>>, vector<128x128xbf16>
    %cst = arith.constant dense<0.000000e+00> : vector<128x128xf32>
    %2 = tpu.matmul %0, %1, %cst {dimension_numbers = #tpu.dot_dimension_numbers<[1], [0], [0], [1], [0, 0, 1, 1], [], []>} : vector<128x128xbf16>, vector<128x128xbf16>, vector<128x128xf32> -> vector<128x128xf32>
    %c0_3 = arith.constant 0 : index
    %c0_4 = arith.constant 0 : index
    %3 = vector.load %arg3[%c0_3, %c0_4] : memref<1x128xf32, #tpu.memory_space<vmem>>, vector<1x128xf32>
    %4 = vector.broadcast %3 : vector<1x128xf32> to vector<128x128xf32>
    %5 = arith.addf %2, %4 : vector<128x128xf32>
    %cst_5 = arith.constant 0.000000e+00 : f32
    %6 = vector.broadcast %cst_5 : f32 to vector<128x128xf32>
    %7 = arith.maximumf %5, %6 : vector<128x128xf32>
    %c0_6 = arith.constant 0 : index
    %c0_7 = arith.constant 0 : index
    %8 = vector.load %arg4[%c0_6, %c0_7] : memref<128x128xf32, #tpu.memory_space<vmem>>, vector<128x128xf32>
    tpu.vector_store %arg4[%c0_6, %c0_7], %7 {strides = array<i32>} : memref<128x128xf32, #tpu.memory_space<vmem>>, vector<128x128xf32>,
    return
  }
  func.func @transform_0(%arg0: i32) -> (i32, i32) {
    %c0_i32 = arith.constant 0 : i32
    %c0_i32_0 = arith.constant 0 : i32
    return %arg0, %c0_i32 : i32, i32
  }
  func.func @transform_1(%arg0: i32) -> (i32, i32) {
    %c0_i32 = arith.constant 0 : i32
    %c0_i32_0 = arith.constant 0 : i32
    %c0_i32_1 = arith.constant 0 : i32
    return %c0_i32, %c0_i32_0 : i32, i32
  }
  func.func @transform_2(%arg0: i32) -> (i32, i32) {
    %c0_i32 = arith.constant 0 : i32
    %c0_i32_0 = arith.constant 0 : i32
    %c0_i32_1 = arith.constant 0 : i32
    return %c0_i32, %c0_i32_0 : i32, i32
  }
  func.func @transform_3(%arg0: i32) -> (i32, i32) {
    %c0_i32 = arith.constant 0 : i32
    %c0_i32_0 = arith.constant 0 : i32
    return %arg0, %c0_i32 : i32, i32
  }
}

</mosaic_0001>

<llo_original>
// kernel: _apply.1
$region0: #{_apply.1}
  #allocation0 [shape = 'u32[]', space=smem, size = 0x4, offset = 0x4, fixed_abs, tag = 'smem constant byte address 0x4 - core index']
  #allocation1 [shape = 'u32[144,128]{1,0:T(1,128)}', space=vmem, size = 0x12000, scoped, tag = 'internal scratch']
  %s0 = inlined_call_operand.vmem [shape: bf16[128,128], index: 0, kind: input, shape index: {}]
  %s1 = inlined_call_operand.vmem [shape: bf16[128,128], index: 1, kind: input, shape index: {}]
  %s2 = inlined_call_operand.vmem [shape: f32[1,128], index: 2, kind: input, shape index: {}]
  %s3 = inlined_call_operand.vmem [shape: f32[128,128], index: 3, kind: output, shape index: {}]
  %s4 = sld [smem:[#allocation0]]
  $region22: #{_apply.1} parent=0
    _
  %s6 = ssub.s32 1, %s4
  %s7 = scalar_select 0, %s6, %s4
  // Predicated region
  $region2: #{_apply.1} parent=0 // pred_check
    _
  $region3: #{_apply.1} parent=0 // pred_check_branch
    %9 = sbr.rel (0) target = $region5
  $region4: #{_apply.1} parent=0 // pred_region
    _
  $region5: #{_apply.1} parent=0 // pred_fallthru
    _
  // Predicated region
  $region6: #{_apply.1} parent=0 // pred_check
    _
  $region7: #{_apply.1} parent=0 // pred_check_branch
    %11 = sbr.rel (0) target = $region9
  $region8: #{_apply.1} parent=0 // pred_region
    _
  $region9: #{_apply.1} parent=0 // pred_fallthru
    _
  // Predicated region
  $region10: #{_apply.1} parent=0 // pred_check
    _
  $region11: #{_apply.1} parent=0 // pred_check_branch
    %13 = sbr.rel (0) target = $region13
  $region12: #{_apply.1} parent=0 // pred_region
    _
  $region13: #{_apply.1} parent=0 // pred_fallthru
    _
  %v15 = vld [vmem:[%s0] sm:$0xf]
  %v16 = vld [vmem:[%s0 + $0x4] sm:$0xf]
  %v17 = vld [vmem:[%s0 + $0x8] sm:$0xf]
  %v18 = vld [vmem:[%s0 + $0xc] sm:$0xf]
  %v19 = vld [vmem:[%s0 + $0x10] sm:$0xf]
  %v20 = vld [vmem:[%s0 + $0x14] sm:$0xf]
  %v21 = vld [vmem:[%s0 + $0x18] sm:$0xf]
  %v22 = vld [vmem:[%s0 + $0x1c] sm:$0xf]
  %v23 = vld [vmem:[%s0 + $0x20] sm:$0xf]
  %v24 = vld [vmem:[%s0 + $0x24] sm:$0xf]
  %v25 = vld [vmem:[%s0 + $0x28] sm:$0xf]
  %v26 = vld [vmem:[%s0 + $0x2c] sm:$0xf]
  %v27 = vld [vmem:[%s0 + $0x30] sm:$0xf]
  %v28 = vld [vmem:[%s0 + $0x34] sm:$0xf]
  %v29 = vld [vmem:[%s0 + $0x38] sm:$0xf]
  %v30 = vld [vmem:[%s0 + $0x3c] sm:$0xf]
  %v31 = vld [vmem:[%s1] sm:$0xf]
  %v32 = vld [vmem:[%s1 + $0x4] sm:$0xf]
  %v33 = vld [vmem:[%s1 + $0x8] sm:$0xf]
  %v34 = vld [vmem:[%s1 + $0xc] sm:$0xf]
  %v35 = vld [vmem:[%s1 + $0x10] sm:$0xf]
  %v36 = vld [vmem:[%s1 + $0x14] sm:$0xf]
  %v37 = vld [vmem:[%s1 + $0x18] sm:$0xf]
  %v38 = vld [vmem:[%s1 + $0x1c] sm:$0xf]
  %v39 = vld [vmem:[%s1 + $0x20] sm:$0xf]
  %v40 = vld [vmem:[%s1 + $0x24] sm:$0xf]
  %v41 = vld [vmem:[%s1 + $0x28] sm:$0xf]
  %v42 = vld [vmem:[%s1 + $0x2c] sm:$0xf]
  %v43 = vld [vmem:[%s1 + $0x30] sm:$0xf]
  %v44 = vld [vmem:[%s1 + $0x34] sm:$0xf]
  %v45 = vld [vmem:[%s1 + $0x38] sm:$0xf]
  %v46 = vld [vmem:[%s1 + $0x3c] sm:$0xf]
  %v47 = vld [vmem:[%s2] sm:$0x1]
  %v49 = vlaneseq
  %v50 = vshrl.u32 %v49, 7
  %v51 = vsub.s32 0, %v50
  %v52 = vrot.slane %v47, %v51
  %v70 = vunpack.c.l.b16 %v15
  %v71 = vunpack.c.l.b16 %v16
  %v72 = vunpack.c.l.b16 %v17
  %v73 = vunpack.c.l.b16 %v18
  %v74 = vunpack.c.l.b16 %v19
  %v75 = vunpack.c.l.b16 %v20
  %v76 = vunpack.c.l.b16 %v21
  %v77 = vunpack.c.l.b16 %v22
  %v78 = vunpack.c.l.b16 %v23
  %v79 = vunpack.c.l.b16 %v24
  %v80 = vunpack.c.l.b16 %v25
  %v81 = vunpack.c.l.b16 %v26
  %v82 = vunpack.c.l.b16 %v27
  %v83 = vunpack.c.l.b16 %v28
  %v84 = vunpack.c.l.b16 %v29
  %v85 = vunpack.c.l.b16 %v30
  %v86 = vpack.c.b16 %v71, %v70
  %v87 = vpack.c.b16 %v73, %v72
  %v88 = vpack.c.b16 %v75, %v74
  %v89 = vpack.c.b16 %v77, %v76
  %v90 = vpack.c.b16 %v79, %v78
  %v91 = vpack.c.b16 %v81, %v80
  %v92 = vpack.c.b16 %v83, %v82
  %v93 = vpack.c.b16 %v85, %v84
  %v118 = vunpack.c.l.b16 %v31
  %v119 = vunpack.c.l.b16 %v32
  %v120 = vunpack.c.l.b16 %v33
  %v121 = vunpack.c.l.b16 %v34
  %v122 = vunpack.c.l.b16 %v35
  %v123 = vunpack.c.l.b16 %v36
  %v124 = vunpack.c.l.b16 %v37
  %v125 = vunpack.c.l.b16 %v38
  %v126 = vunpack.c.l.b16 %v39
  %v127 = vunpack.c.l.b16 %v40
  %v128 = vunpack.c.l.b16 %v41
  %v129 = vunpack.c.l.b16 %v42
  %v130 = vunpack.c.l.b16 %v43
  %v131 = vunpack.c.l.b16 %v44
  %v132 = vunpack.c.l.b16 %v45
  %v133 = vunpack.c.l.b16 %v46
  %v134 = vpack.c.b16 %v119, %v118
  %v135 = vpack.c.b16 %v121, %v120
  %v136 = vpack.c.b16 %v123, %v122
  %v137 = vpack.c.b16 %v125, %v124
  %v138 = vpack.c.b16 %v127, %v126
  %v139 = vpack.c.b16 %v129, %v128
  %v140 = vpack.c.b16 %v131, %v130
  %v141 = vpack.c.b16 %v133, %v132
  %150 = vmatprep.subr.bf16.mxu0 0
  %151 = vmatpush1.bf16.msra.mxu0 %v134
  %152 = vmatprep.subr.bf16.mxu0 0
  %153 = vmatpush1.bf16.msra.mxu0 %v135
  %154 = vmatprep.subr.bf16.mxu0 0
  %155 = vmatpush1.bf16.msra.mxu0 %v136
  %156 = vmatprep.subr.bf16.mxu0 0
  %157 = vmatpush1.bf16.msra.mxu0 %v137
  %158 = vmatprep.subr.bf16.mxu0 0
  %159 = vmatpush1.bf16.msra.mxu0 %v138
  %160 = vmatprep.subr.bf16.mxu0 0
  %161 = vmatpush1.bf16.msra.mxu0 %v139
  %162 = vmatprep.subr.bf16.mxu0 0
  %163 = vmatpush1.bf16.msra.mxu0 %v140
  %164 = vmatprep.subr.bf16.mxu0 0
  %165 = vmatpush1.bf16.msra.mxu0 %v141
  %166 = vmatprep.subr.bf16.mxu0 0
  %167 = vmatpush1.bf16.msra.mxu0 0
  %168 = vmatprep.subr.bf16.mxu0 0
  %169 = vmatpush1.bf16.msra.mxu0 0
  %170 = vmatprep.subr.bf16.mxu0 0
  %171 = vmatpush1.bf16.msra.mxu0 0
  %172 = vmatprep.subr.bf16.mxu0 0
  %173 = vmatpush1.bf16.msra.mxu0 0
  %174 = vmatprep.subr.bf16.mxu0 0
  %175 = vmatpush1.bf16.msra.mxu0 0
  %176 = vmatprep.subr.bf16.mxu0 0
  %177 = vmatpush1.bf16.msra.mxu0 0
  %178 = vmatprep.subr.bf16.mxu0 0
  %179 = vmatpush1.bf16.msra.mxu0 0
  %180 = vmatprep.subr.bf16.mxu0 0
  %181 = vmatpush1.bf16.msra.mxu0 0
  %182 = vmatprep.mubr.bf16.mxu0 0
  %183 = vmatmul.mubr.bf16.gmra.mrb[0].mxu0 %v86
  %v184 = vpop.f32.mrb[0].mxu0
  %v185 = vadd.f32 %v52, %v184
  %v186 = vpop.f32.mrb[0].mxu0
  %v187 = vpop.f32.mrb[0].mxu0
  %v188 = vadd.f32 %v52, %v187
  %v189 = vpop.f32.mrb[0].mxu0
  %190 = vmatprep.mubr.bf16.mxu0 0
  %191 = vmatmul.mubr.bf16.gmra.mrb[0].mxu0 %v87
  %v192 = vpop.f32.mrb[0].mxu0
  %v193 = vadd.f32 %v52, %v192
  %v194 = vpop.f32.mrb[0].mxu0
  %v195 = vpop.f32.mrb[0].mxu0
  %v196 = vadd.f32 %v52, %v195
  %v197 = vpop.f32.mrb[0].mxu0
  %198 = vmatprep.mubr.bf16.mxu0 0
  %199 = vmatmul.mubr.bf16.gmra.mrb[0].mxu0 %v88
  %v200 = vpop.f32.mrb[0].mxu0
  %v201 = vadd.f32 %v52, %v200
  %v202 = vpop.f32.mrb[0].mxu0
  %v203 = vpop.f32.mrb[0].mxu0
  %v204 = vadd.f32 %v52, %v203
  %v205 = vpop.f32.mrb[0].mxu0
  %206 = vmatprep.mubr.bf16.mxu0 0
  %207 = vmatmul.mubr.bf16.gmra.mrb[0].mxu0 %v89
  %v208 = vpop.f32.mrb[0].mxu0
  %v209 = vadd.f32 %v52, %v208
  %v210 = vpop.f32.mrb[0].mxu0
  %v211 = vpop.f32.mrb[0].mxu0
  %v212 = vadd.f32 %v52, %v211
  %v213 = vpop.f32.mrb[0].mxu0
  %214 = vmatprep.mubr.bf16.mxu0 0
  %215 = vmatmul.mubr.bf16.gmra.mrb[0].mxu0 %v90
  %v216 = vpop.f32.mrb[0].mxu0
  %v217 = vadd.f32 %v52, %v216
  %v218 = vpop.f32.mrb[0].mxu0
  %v219 = vpop.f32.mrb[0].mxu0
  %v220 = vadd.f32 %v52, %v219
  %v221 = vpop.f32.mrb[0].mxu0
  %222 = vmatprep.mubr.bf16.mxu0 0
  %223 = vmatmul.mubr.bf16.gmra.mrb[0].mxu0 %v91
  %v224 = vpop.f32.mrb[0].mxu0
  %v225 = vadd.f32 %v52, %v224
  %v226 = vpop.f32.mrb[0].mxu0
  %v227 = vpop.f32.mrb[0].mxu0
  %v228 = vadd.f32 %v52, %v227
  %v229 = vpop.f32.mrb[0].mxu0
  %230 = vmatprep.mubr.bf16.mxu0 0
  %231 = vmatmul.mubr.bf16.gmra.mrb[0].mxu0 %v92
  %v232 = vpop.f32.mrb[0].mxu0
  %v233 = vadd.f32 %v52, %v232
  %v234 = vpop.f32.mrb[0].mxu0
  %v235 = vpop.f32.mrb[0].mxu0
  %v236 = vadd.f32 %v52, %v235
  %v237 = vpop.f32.mrb[0].mxu0
  %238 = vmatprep.mubr.bf16.mxu0 0
  %239 = vmatmul.mubr.bf16.gmra.mrb[0].mxu0 %v93
  %v240 = vpop.f32.mrb[0].mxu0
  %v241 = vadd.f32 %v52, %v240
  %v242 = vpop.f32.mrb[0].mxu0
  %v243 = vpop.f32.mrb[0].mxu0
  %v244 = vadd.f32 %v52, %v243
  %v245 = vpop.f32.mrb[0].mxu0
  %246 = vdwg.mxu0
  %v247 = vmax.f32 %v185, 0.0
  %v248 = vmax.f32 %v188, 0.0
  %v249 = vmax.f32 %v193, 0.0
  %v250 = vmax.f32 %v196, 0.0
  %v251 = vmax.f32 %v201, 0.0
  %v252 = vmax.f32 %v204, 0.0
  %v253 = vmax.f32 %v209, 0.0
  %v254 = vmax.f32 %v212, 0.0
  %v255 = vmax.f32 %v217, 0.0
  %v256 = vmax.f32 %v220, 0.0
  %v257 = vmax.f32 %v225, 0.0
  %v258 = vmax.f32 %v228, 0.0
  %v259 = vmax.f32 %v233, 0.0
  %v260 = vmax.f32 %v236, 0.0
  %v261 = vmax.f32 %v241, 0.0
  %v262 = vmax.f32 %v244, 0.0
  %263 = vst [vmem:[%s3] sm:$0xff] %v247
  %264 = vst [vmem:[%s3 + $0x8] sm:$0xff] %v248
  %265 = vst [vmem:[%s3 + $0x10] sm:$0xff] %v249
  %266 = vst [vmem:[%s3 + $0x18] sm:$0xff] %v250
  %267 = vst [vmem:[%s3 + $0x20] sm:$0xff] %v251
  %268 = vst [vmem:[%s3 + $0x28] sm:$0xff] %v252
  %269 = vst [vmem:[%s3 + $0x30] sm:$0xff] %v253
  %270 = vst [vmem:[%s3 + $0x38] sm:$0xff] %v254
  %271 = vst [vmem:[%s3 + $0x40] sm:$0xff] %v255
  %272 = vst [vmem:[%s3 + $0x48] sm:$0xff] %v256
  %273 = vst [vmem:[%s3 + $0x50] sm:$0xff] %v257
  %274 = vst [vmem:[%s3 + $0x58] sm:$0xff] %v258
  %275 = vst [vmem:[%s3 + $0x60] sm:$0xff] %v259
  %276 = vst [vmem:[%s3 + $0x68] sm:$0xff] %v260
  %277 = vst [vmem:[%s3 + $0x70] sm:$0xff] %v261
  %278 = vst [vmem:[%s3 + $0x78] sm:$0xff] %v262
  // Predicated region
  $region14: #{_apply.1} parent=0 // pred_check
    _
  $region15: #{_apply.1} parent=0 // pred_check_branch
    %280 = sbr.rel (0) target = $region17
  $region16: #{_apply.1} parent=0 // pred_region
    _
  $region17: #{_apply.1} parent=0 // pred_fallthru
    _
  // Predicated region
  $region18: #{_apply.1} parent=0 // pred_check
    _
  $region19: #{_apply.1} parent=0 // pred_check_branch
    %282 = sbr.rel (0) target = $region21
  $region20: #{_apply.1} parent=0 // pred_region
    _
  $region21: #{_apply.1} parent=0 // pred_fallthru
    _

</llo_original>
